<compile_context>
chip_gen: v7x
topology: tpu7x:2x2x1
jax: 0.10.0
libtpu: 0.0.40
codegen_flags: <defaults>
</compile_context>

<pallas_src>
import jax
import jax.numpy as jnp
from jax.experimental import pallas as pl
from jax.experimental.pallas import tpu as pltpu

# config.* from the reference module
HIDDEN1_UNITS = 64
HIDDEN2_UNITS = 32

_SUBLANE = 8
_MAX_BATCH_TILE = 4096   # per-tile VMEM is ~0.5 MiB even at 4096 rows
_MIN_SPLIT_ROWS = 256    # split into >=2 grid steps above this (v7x dual-TC)


def _round_up(x, m):
    return ((x + m - 1) // m) * m


def _actor_kernel(ma_ref, s_ref, w1_ref, b1_ref, w2_ref, b2_ref, w3_ref, b3_ref,
                  o_ref):
    """Fused 3-layer MLP for one batch tile.

    Matmuls run on the MXU with bf16 operands and f32 accumulation; all
    elementwise work (bias add, relu, tanh, max_action scale) stays in f32.
    """
    max_action = ma_ref[0]

    # f32 state tile -> bf16 on the VPU (free slot), feeds the MXU.
    x = s_ref[...].astype(jnp.bfloat16)                          # (TB, S)

    h1 = jnp.dot(x, w1_ref[...], preferred_element_type=jnp.float32) + b1_ref[...]
    h1 = jnp.maximum(h1, 0.0).astype(jnp.bfloat16)               # (TB, H1)

    h2 = jnp.dot(h1, w2_ref[...], preferred_element_type=jnp.float32) + b2_ref[...]
    h2 = jnp.maximum(h2, 0.0).astype(jnp.bfloat16)               # (TB, H2)

    out = jnp.dot(h2, w3_ref[...], preferred_element_type=jnp.float32) + b3_ref[...]
    o_ref[...] = (max_action * jnp.tanh(out)).astype(o_ref.dtype)  # (TB, A)


def prepare_actor_params(params):
    """One-time prep: bf16 matmul weights, f32 biases.  Call once, reuse."""
    return {
        "w1": params["w1"].astype(jnp.bfloat16), "b1": params["b1"].astype(jnp.float32),
        "w2": params["w2"].astype(jnp.bfloat16), "b2": params["b2"].astype(jnp.float32),
        "w3": params["w3"].astype(jnp.bfloat16), "b3": params["b3"].astype(jnp.float32),
    }


def actor_forward(state, params, max_action):
    """state: (B, state_dim) f32. params: (in,out) weights, (1,out) biases
    (raw f32 or already prepared via prepare_actor_params)."""
    # No-ops if params were prepared already.
    w1 = params["w1"].astype(jnp.bfloat16)
    w2 = params["w2"].astype(jnp.bfloat16)
    w3 = params["w3"].astype(jnp.bfloat16)
    b1 = params["b1"].astype(jnp.float32)
    b2 = params["b2"].astype(jnp.float32)
    b3 = params["b3"].astype(jnp.float32)

    B, state_dim = state.shape
    action_dim = w3.shape[1]

    # ---- batch tiling: choose #tiles first, then a tile that divides exactly ----
    b8 = _round_up(max(B, _SUBLANE), _SUBLANE)
    n_tiles = pl.cdiv(b8, _MAX_BATCH_TILE)
    if b8 >= _MIN_SPLIT_ROWS:
        n_tiles = max(n_tiles, 2)          # keep both v7x TensorCores busy
    tb = _round_up(pl.cdiv(b8, n_tiles), _SUBLANE)
    b_pad = n_tiles * tb                   # pads at most 8*n_tiles - 1 rows
    if b_pad != B:
        state = jnp.pad(state, ((0, b_pad - B), (0, 0)))

    # max_action as an SMEM scalar (no recompile per value, traced values OK).
    ma = jnp.asarray(max_action, jnp.float32).reshape((1,))

    const = lambda arr: pl.BlockSpec(arr.shape, lambda i: (0,) * arr.ndim)

    out = pl.pallas_call(
        _actor_kernel,
        out_shape=jax.ShapeDtypeStruct((b_pad, action_dim), jnp.float32),
        grid=(n_tiles,),
        in_specs=[
            pl.BlockSpec(memory_space=pltpu.MemorySpace.SMEM),   # max_action
            pl.BlockSpec((tb, state_dim), lambda i: (i, 0)),     # state tile (f32)
            const(w1), const(b1),
            const(w2), const(b2),
            const(w3), const(b3),
        ],
        # Last dim equals the full array dim -> allowed, and writeback is only
        # the real action_dim columns (no 128-lane padding amplification).
        out_specs=pl.BlockSpec((tb, action_dim), lambda i: (i, 0)),
        compiler_params=pltpu.CompilerParams(
            dimension_semantics=("parallel",)),
    )(ma, state, w1, b1, w2, b2, w3, b3)

    return out[:B]


def init_actor_params(key, state_dim, action_dim):
    """Deterministic init mimicking nn.Linear: U(-1/sqrt(fan_in), 1/sqrt(fan_in)).
    Weights stored as (in, out); biases as (1, out)."""
    dims = [(state_dim, HIDDEN1_UNITS), (HIDDEN1_UNITS, HIDDEN2_UNITS),
            (HIDDEN2_UNITS, action_dim)]
    params = {}
    for i, (fan_in, fan_out) in enumerate(dims, start=1):
        key, kw, kb = jax.random.split(key, 3)
        bound = 1.0 / jnp.sqrt(float(fan_in))
        params[f"w{i}"] = jax.random.uniform(
            kw, (fan_in, fan_out), jnp.float32, -bound, bound)
        params[f"b{i}"] = jax.random.uniform(
            kb, (1, fan_out), jnp.float32, -bound, bound)
    return params


def actor_forward_ref(state, params, max_action, *, bf16=True):
    """Pure-JAX reference. bf16=True mirrors the kernel's matmul dtypes."""
    cast = (lambda a: a.astype(jnp.bfloat16)) if bf16 else (lambda a: a.astype(jnp.float32))
    p = {k: v.astype(jnp.float32) for k, v in params.items()}
    h1 = jnp.maximum(
        jnp.dot(cast(state), cast(p["w1"]),
                preferred_element_type=jnp.float32) + p["b1"], 0.0)
    h2 = jnp.maximum(
        jnp.dot(cast(h1), cast(p["w2"]),
                preferred_element_type=jnp.float32) + p["b2"], 0.0)
    out = jnp.dot(cast(h2), cast(p["w3"]),
                  preferred_element_type=jnp.float32) + p["b3"]
    return max_action * jnp.tanh(out)


if __name__ == "__main__":
    key = jax.random.PRNGKey(0)
    batch, state_dim, action_dim = 8, 16, 8
    max_action = 2.0

    key, k_params, k_state = jax.random.split(key, 3)
    params = init_actor_params(k_params, state_dim, action_dim)
    prepared = prepare_actor_params(params)   # bf16 weights hoisted out of the call

    state = jax.random.normal(k_state, (batch, state_dim), jnp.float32)

    out = jax.block_until_ready(actor_forward(state, prepared, max_action))
    assert out.shape == (batch, action_dim)

    # Exact-ish check vs. a reference using the same bf16 matmul dtypes.
    ref_bf16 = actor_forward_ref(state, params, max_action, bf16=True)
    assert jnp.allclose(out, ref_bf16, atol=1e-3, rtol=1e-3)

    # Semantics check vs. the full-f32 PyTorch-equivalent forward.
    ref_f32 = actor_forward_ref(state, params, max_action, bf16=False)
    assert jnp.allclose(out, ref_f32, atol=5e-2, rtol=5e-2)

    # Exercise the multi-tile path (grid=2, batch divides exactly: tb=1032).
    key, k_big = jax.random.split(key)
    big_state = jax.random.normal(k_big, (2064, state_dim), jnp.float32)
    big_out = jax.block_until_ready(actor_forward(big_state, prepared, max_action))
    big_ref = actor_forward_ref(big_state, params, max_action, bf16=True)
    assert big_out.shape == (2064, action_dim)
    assert jnp.allclose(big_out, big_ref, atol=1e-3, rtol=1e-3)

    # Exercise the small-pad path (B=300 -> 2 tiles of 152, 4 padded rows).
    key, k_odd = jax.random.split(key)
    odd_state = jax.random.normal(k_odd, (300, state_dim), jnp.float32)
    odd_out = jax.block_until_ready(actor_forward(odd_state, prepared, max_action))
    odd_ref = actor_forward_ref(odd_state, params, max_action, bf16=True)
    assert odd_out.shape == (300, action_dim)
    assert jnp.allclose(odd_out, odd_ref, atol=1e-3, rtol=1e-3)

    print("KERNEL_OK")
</pallas_src>

<mosaic_0001>
module attributes {stable_mosaic.version = 11 : i64} {
  func.func @_actor_kernel(%arg0: i32, %arg1: memref<1xf32, #tpu.memory_space<smem>>, %arg2: memref<8x16xf32, #tpu.memory_space<vmem>>, %arg3: memref<16x64xbf16, #tpu.memory_space<vmem>>, %arg4: memref<1x64xf32, #tpu.memory_space<vmem>>, %arg5: memref<64x32xbf16, #tpu.memory_space<vmem>>, %arg6: memref<1x32xf32, #tpu.memory_space<vmem>>, %arg7: memref<32x8xbf16, #tpu.memory_space<vmem>>, %arg8: memref<1x8xf32, #tpu.memory_space<vmem>>, %arg9: memref<8x8xf32, #tpu.memory_space<vmem>>) attributes {dimension_semantics = [#tpu.dimension_semantics<parallel>], iteration_bounds = array<i64: 1>, scalar_prefetch = 0 : i64, scratch_operands = 0 : i64, tpu.core_type = #tpu.core_type<tc>, window_params = [{transform_indices = @transform_0, window_bounds = array<i64: 1>}, {transform_indices = @transform_1, window_bounds = array<i64: 8, 16>}, {pipeline_mode = #tpu.pipeline_mode<synchronous>, transform_indices = @transform_2, window_bounds = array<i64: 16, 64>}, {pipeline_mode = #tpu.pipeline_mode<synchronous>, transform_indices = @transform_3, window_bounds = array<i64: 1, 64>}, {pipeline_mode = #tpu.pipeline_mode<synchronous>, transform_indices = @transform_4, window_bounds = array<i64: 64, 32>}, {pipeline_mode = #tpu.pipeline_mode<synchronous>, transform_indices = @transform_5, window_bounds = array<i64: 1, 32>}, {pipeline_mode = #tpu.pipeline_mode<synchronous>, transform_indices = @transform_6, window_bounds = array<i64: 32, 8>}, {pipeline_mode = #tpu.pipeline_mode<synchronous>, transform_indices = @transform_7, window_bounds = array<i64: 1, 8>}, {transform_indices = @transform_8, window_bounds = array<i64: 8, 8>}]} {
    %c0 = arith.constant 0 : index
    %0 = memref.load %arg1[%c0] : memref<1xf32, #tpu.memory_space<smem>>
    %c0_0 = arith.constant 0 : index
    %c0_1 = arith.constant 0 : index
    %1 = vector.load %arg2[%c0_0, %c0_1] : memref<8x16xf32, #tpu.memory_space<vmem>>, vector<8x16xf32>
    %2 = arith.truncf %1 : vector<8x16xf32> to vector<8x16xbf16>
    %c0_2 = arith.constant 0 : index
    %c0_3 = arith.constant 0 : index
    %3 = vector.load %arg3[%c0_2, %c0_3] : memref<16x64xbf16, #tpu.memory_space<vmem>>, vector<16x64xbf16>
    %cst = arith.constant dense<0.000000e+00> : vector<8x64xf32>
    %4 = tpu.matmul %2, %3, %cst {dimension_numbers = #tpu.dot_dimension_numbers<[1], [0], [0], [1], [0, 0, 1, 1], [], []>} : vector<8x16xbf16>, vector<16x64xbf16>, vector<8x64xf32> -> vector<8x64xf32>
    %c0_4 = arith.constant 0 : index
    %c0_5 = arith.constant 0 : index
    %5 = vector.load %arg4[%c0_4, %c0_5] : memref<1x64xf32, #tpu.memory_space<vmem>>, vector<1x64xf32>
    %6 = vector.broadcast %5 : vector<1x64xf32> to vector<8x64xf32>
    %7 = arith.addf %4, %6 : vector<8x64xf32>
    %cst_6 = arith.constant 0.000000e+00 : f32
    %8 = vector.broadcast %cst_6 : f32 to vector<8x64xf32>
    %9 = arith.maximumf %7, %8 : vector<8x64xf32>
    %10 = arith.truncf %9 : vector<8x64xf32> to vector<8x64xbf16>
    %c0_7 = arith.constant 0 : index
    %c0_8 = arith.constant 0 : index
    %11 = vector.load %arg5[%c0_7, %c0_8] : memref<64x32xbf16, #tpu.memory_space<vmem>>, vector<64x32xbf16>
    %cst_9 = arith.constant dense<0.000000e+00> : vector<8x32xf32>
    %12 = tpu.matmul %10, %11, %cst_9 {dimension_numbers = #tpu.dot_dimension_numbers<[1], [0], [0], [1], [0, 0, 1, 1], [], []>} : vector<8x64xbf16>, vector<64x32xbf16>, vector<8x32xf32> -> vector<8x32xf32>
    %c0_10 = arith.constant 0 : index
    %c0_11 = arith.constant 0 : index
    %13 = vector.load %arg6[%c0_10, %c0_11] : memref<1x32xf32, #tpu.memory_space<vmem>>, vector<1x32xf32>
    %14 = vector.broadcast %13 : vector<1x32xf32> to vector<8x32xf32>
    %15 = arith.addf %12, %14 : vector<8x32xf32>
    %cst_12 = arith.constant 0.000000e+00 : f32
    %16 = vector.broadcast %cst_12 : f32 to vector<8x32xf32>
    %17 = arith.maximumf %15, %16 : vector<8x32xf32>
    %18 = arith.truncf %17 : vector<8x32xf32> to vector<8x32xbf16>
    %c0_13 = arith.constant 0 : index
    %c0_14 = arith.constant 0 : index
    %19 = vector.load %arg7[%c0_13, %c0_14] : memref<32x8xbf16, #tpu.memory_space<vmem>>, vector<32x8xbf16>
    %cst_15 = arith.constant dense<0.000000e+00> : vector<8x8xf32>
    %20 = tpu.matmul %18, %19, %cst_15 {dimension_numbers = #tpu.dot_dimension_numbers<[1], [0], [0], [1], [0, 0, 1, 1], [], []>} : vector<8x32xbf16>, vector<32x8xbf16>, vector<8x8xf32> -> vector<8x8xf32>
    %c0_16 = arith.constant 0 : index
    %c0_17 = arith.constant 0 : index
    %21 = vector.load %arg8[%c0_16, %c0_17] : memref<1x8xf32, #tpu.memory_space<vmem>>, vector<1x8xf32>
    %22 = vector.broadcast %21 : vector<1x8xf32> to vector<8x8xf32>
    %23 = arith.addf %20, %22 : vector<8x8xf32>
    %24 = math.tanh %23 : vector<8x8xf32>
    %25 = vector.broadcast %0 : f32 to vector<8x8xf32>
    %26 = arith.mulf %25, %24 : vector<8x8xf32>
    %c0_18 = arith.constant 0 : index
    %c0_19 = arith.constant 0 : index
    %27 = vector.load %arg9[%c0_18, %c0_19] : memref<8x8xf32, #tpu.memory_space<vmem>>, vector<8x8xf32>
    tpu.vector_store %arg9[%c0_18, %c0_19], %26 {strides = array<i32>} : memref<8x8xf32, #tpu.memory_space<vmem>>, vector<8x8xf32>,
    return
  }
  func.func @transform_0(%arg0: i32) -> i32 {
    %c0_i32 = arith.constant 0 : i32
    %c0_i32_0 = arith.constant 0 : i32
    return %c0_i32 : i32
  }
  func.func @transform_1(%arg0: i32) -> (i32, i32) {
    %c0_i32 = arith.constant 0 : i32
    %c0_i32_0 = arith.constant 0 : i32
    return %arg0, %c0_i32 : i32, i32
  }
  func.func @transform_2(%arg0: i32) -> (i32, i32) {
    %c0_i32 = arith.constant 0 : i32
    %c0_i32_0 = arith.constant 0 : i32
    %c0_i32_1 = arith.constant 0 : i32
    return %c0_i32, %c0_i32_0 : i32, i32
  }
  func.func @transform_3(%arg0: i32) -> (i32, i32) {
    %c0_i32 = arith.constant 0 : i32
    %c0_i32_0 = arith.constant 0 : i32
    %c0_i32_1 = arith.constant 0 : i32
    return %c0_i32, %c0_i32_0 : i32, i32
  }
  func.func @transform_4(%arg0: i32) -> (i32, i32) {
    %c0_i32 = arith.constant 0 : i32
    %c0_i32_0 = arith.constant 0 : i32
    %c0_i32_1 = arith.constant 0 : i32
    return %c0_i32, %c0_i32_0 : i32, i32
  }
  func.func @transform_5(%arg0: i32) -> (i32, i32) {
    %c0_i32 = arith.constant 0 : i32
    %c0_i32_0 = arith.constant 0 : i32
    %c0_i32_1 = arith.constant 0 : i32
    return %c0_i32, %c0_i32_0 : i32, i32
  }
  func.func @transform_6(%arg0: i32) -> (i32, i32) {
    %c0_i32 = arith.constant 0 : i32
    %c0_i32_0 = arith.constant 0 : i32
    %c0_i32_1 = arith.constant 0 : i32
    return %c0_i32, %c0_i32_0 : i32, i32
  }
  func.func @transform_7(%arg0: i32) -> (i32, i32) {
    %c0_i32 = arith.constant 0 : i32
    %c0_i32_0 = arith.constant 0 : i32
    %c0_i32_1 = arith.constant 0 : i32
    return %c0_i32, %c0_i32_0 : i32, i32
  }
  func.func @transform_8(%arg0: i32) -> (i32, i32) {
    %c0_i32 = arith.constant 0 : i32
    %c0_i32_0 = arith.constant 0 : i32
    return %arg0, %c0_i32 : i32, i32
  }
}

</mosaic_0001>

<llo_original>
// kernel: tpu_custom_call.1
$region0: #{tpu_custom_call.1}
  #allocation0 [shape = 'u32[]', space=smem, size = 0x4, offset = 0x4, fixed_abs, tag = 'smem constant byte address 0x4 - core index']
  #allocation1 [shape = 'u32[144,128]{1,0:T(1,128)}', space=vmem, size = 0x12000, scoped, tag = 'internal scratch']
  #allocation2 [shape = 'f32[1]{0:T(128)S(6)}', space=smem, size = 0x200, scoped, tag = 'scoped memory for tpu_custom_call.1']
  %s0 = inlined_call_operand.<no memory space> [shape: f32[1], index: 0, kind: input, shape index: {}]
  %s1 = inlined_call_operand.vmem [shape: f32[8,16], index: 1, kind: input, shape index: {}]
  %s2 = inlined_call_operand.vmem [shape: bf16[16,64], index: 2, kind: input, shape index: {}]
  %s3 = inlined_call_operand.vmem [shape: f32[1,64], index: 3, kind: input, shape index: {}]
  %s4 = inlined_call_operand.vmem [shape: bf16[64,32], index: 4, kind: input, shape index: {}]
  %s5 = inlined_call_operand.vmem [shape: f32[1,32], index: 5, kind: input, shape index: {}]
  %s6 = inlined_call_operand.vmem [shape: bf16[32,8], index: 6, kind: input, shape index: {}]
  %s7 = inlined_call_operand.vmem [shape: f32[1,8], index: 7, kind: input, shape index: {}]
  %s8 = inlined_call_operand.hbm [shape: f32[8,8], index: 8, kind: output, shape index: {}]
  %s9 = sld [smem:[#allocation0]]
  $region42: #{tpu_custom_call.1} parent=0
    _
  %s11 = ssub.s32 1, %s9
  %s12 = scalar_select 0, %s11, %s9
  %13 = sst [smem:[#allocation2]] %s0
  $region1: #{tpu_custom_call.1} parent=0
    #allocation3 [shape = 'u8[4096]{0}', space=vmem, size = 0x1000, scoped, tag = 'output window, operand 0, single buffered']
    #allocation4 [shape = 's32[1]{0}', space=sflag, size = 0x4, scoped, tag = 'scoped memory for tpu_custom_call.1']
    %14 = vsyncpa [#allocation4], 0
    // Predicated region
    $region2: #{tpu_custom_call.1} parent=1 // pred_check
      _
    $region3: #{tpu_custom_call.1} parent=1 // pred_check_branch
      %16 = sbr.rel (0) target = $region5
    $region4: #{tpu_custom_call.1} parent=1 // pred_region
      _
    $region5: #{tpu_custom_call.1} parent=1 // pred_fallthru
      _
    // Predicated region
    $region6: #{tpu_custom_call.1} parent=1 // pred_check
      _
    $region7: #{tpu_custom_call.1} parent=1 // pred_check_branch
      %18 = sbr.rel (0) target = $region9
    $region8: #{tpu_custom_call.1} parent=1 // pred_region
      _
    $region9: #{tpu_custom_call.1} parent=1 // pred_fallthru
      _
    // Predicated region
    $region10: #{tpu_custom_call.1} parent=1 // pred_check
      _
    $region11: #{tpu_custom_call.1} parent=1 // pred_check_branch
      %20 = sbr.rel (0) target = $region13
    $region12: #{tpu_custom_call.1} parent=1 // pred_region
      _
    $region13: #{tpu_custom_call.1} parent=1 // pred_fallthru
      _
    // Predicated region
    $region14: #{tpu_custom_call.1} parent=1 // pred_check
      _
    $region15: #{tpu_custom_call.1} parent=1 // pred_check_branch
      %22 = sbr.rel (0) target = $region17
    $region16: #{tpu_custom_call.1} parent=1 // pred_region
      _
    $region17: #{tpu_custom_call.1} parent=1 // pred_fallthru
      _
    // Predicated region
    $region18: #{tpu_custom_call.1} parent=1 // pred_check
      _
    $region19: #{tpu_custom_call.1} parent=1 // pred_check_branch
      %24 = sbr.rel (0) target = $region21
    $region20: #{tpu_custom_call.1} parent=1 // pred_region
      _
    $region21: #{tpu_custom_call.1} parent=1 // pred_fallthru
      _
    // Predicated region
    $region22: #{tpu_custom_call.1} parent=1 // pred_check
      _
    $region23: #{tpu_custom_call.1} parent=1 // pred_check_branch
      %26 = sbr.rel (0) target = $region25
    $region24: #{tpu_custom_call.1} parent=1 // pred_region
      _
    $region25: #{tpu_custom_call.1} parent=1 // pred_fallthru
      _
    // Predicated region
    $region26: #{tpu_custom_call.1} parent=1 // pred_check
      _
    $region27: #{tpu_custom_call.1} parent=1 // pred_check_branch
      %28 = sbr.rel (0) target = $region29
    $region28: #{tpu_custom_call.1} parent=1 // pred_region
      _
    $region29: #{tpu_custom_call.1} parent=1 // pred_fallthru
      _
    // Predicated region
    $region30: #{tpu_custom_call.1} parent=1 // pred_check
      _
    $region31: #{tpu_custom_call.1} parent=1 // pred_check_branch
      %30 = sbr.rel (0) target = $region33
    $region32: #{tpu_custom_call.1} parent=1 // pred_region
      _
    $region33: #{tpu_custom_call.1} parent=1 // pred_fallthru
      _
    %s32 = sld [smem:[#allocation2]]
    %v33 = vld [vmem:[%s1] sm:$0xff]
    %v34 = vpack.c.bf16 %v33, %v33
    %v35 = vld [vmem:[%s2] sm:$0xf]
    %v36 = vld [vmem:[%s2 + $0x4] sm:$0xf]
    %v37 = vld [vmem:[%s3] sm:$0x1]
    %v39 = vlaneseq
    %v40 = vshrl.u32 %v39, 7
    %v41 = vsub.s32 0, %v40
    %v42 = vrot.slane %v37, %v41
    %v46 = vunpack.c.l.b16 %v35
    %v47 = vunpack.c.l.b16 %v36
    %v48 = vpack.c.b16 %v47, %v46
    %vm50 = vcmask 130048
    %v52 = vsel %vm50, %v34, 0
    %54 = vmatprep.subr.bf16.mxu0 0
    %55 = vmatpush1.bf16.msra.mxu0 %v48
    %56 = vmatprep.subr.bf16.mxu0 0
    %57 = vmatpush1.bf16.msra.mxu0 0
    %58 = vmatprep.subr.bf16.mxu0 0
    %59 = vmatpush1.bf16.msra.mxu0 0
    %60 = vmatprep.subr.bf16.mxu0 0
    %61 = vmatpush1.bf16.msra.mxu0 0
    %62 = vmatprep.subr.bf16.mxu0 0
    %63 = vmatpush1.bf16.msra.mxu0 0
    %64 = vmatprep.subr.bf16.mxu0 0
    %65 = vmatpush1.bf16.msra.mxu0 0
    %66 = vmatprep.subr.bf16.mxu0 0
    %67 = vmatpush1.bf16.msra.mxu0 0
    %68 = vmatprep.subr.bf16.mxu0 0
    %69 = vmatpush1.bf16.msra.mxu0 0
    %70 = vmatprep.subr.bf16.mxu0 0
    %71 = vmatpush1.bf16.msra.mxu0 0
    %72 = vmatprep.subr.bf16.mxu0 0
    %73 = vmatpush1.bf16.msra.mxu0 0
    %74 = vmatprep.subr.bf16.mxu0 0
    %75 = vmatpush1.bf16.msra.mxu0 0
    %76 = vmatprep.subr.bf16.mxu0 0
    %77 = vmatpush1.bf16.msra.mxu0 0
    %78 = vmatprep.subr.bf16.mxu0 0
    %79 = vmatpush1.bf16.msra.mxu0 0
    %80 = vmatprep.subr.bf16.mxu0 0
    %81 = vmatpush1.bf16.msra.mxu0 0
    %82 = vmatprep.subr.bf16.mxu0 0
    %83 = vmatpush1.bf16.msra.mxu0 0
    %84 = vmatprep.subr.bf16.mxu0 0
    %85 = vmatpush1.bf16.msra.mxu0 0
    %86 = vmatprep.mubr.bf16.mxu0 0
    %87 = vmatmul.mubr.bf16.gmra.mrb[0].mxu0 %v52
    %v88 = vpop.f32.mrb[0].mxu0
    %v89 = vadd.f32 %v42, %v88
    %v90 = vpop.f32.mrb[0].mxu0
    %v91 = vpop.f32.mrb[0].mxu0
    %v92 = vpop.f32.mrb[0].mxu0
    %93 = vdwg.mxu0
    %v94 = vmax.f32 %v89, 0.0
    %v95 = vpack.c.bf16 %v94, %v94
    %v96 = vld [vmem:[%s4] sm:$0xf]
    %v97 = vld [vmem:[%s4 + $0x4] sm:$0xf]
    %v98 = vld [vmem:[%s4 + $0x8] sm:$0xf]
    %v99 = vld [vmem:[%s4 + $0xc] sm:$0xf]
    %v100 = vld [vmem:[%s4 + $0x10] sm:$0xf]
    %v101 = vld [vmem:[%s4 + $0x14] sm:$0xf]
    %v102 = vld [vmem:[%s4 + $0x18] sm:$0xf]
    %v103 = vld [vmem:[%s4 + $0x1c] sm:$0xf]
    %v104 = vld [vmem:[%s5] sm:$0x1]
    %v106 = vlaneseq
    %v107 = vshrl.u32 %v106, 7
    %v108 = vsub.s32 0, %v107
    %v109 = vrot.slane %v104, %v108
    %v119 = vunpack.c.l.b16 %v96
    %v120 = vunpack.c.l.b16 %v97
    %v121 = vunpack.c.l.b16 %v98
    %v122 = vunpack.c.l.b16 %v99
    %v123 = vunpack.c.l.b16 %v100
    %v124 = vunpack.c.l.b16 %v101
    %v125 = vunpack.c.l.b16 %v102
    %v126 = vunpack.c.l.b16 %v103
    %v127 = vpack.c.b16 %v120, %v119
    %v128 = vpack.c.b16 %v122, %v121
    %v129 = vpack.c.b16 %v124, %v123
    %v130 = vpack.c.b16 %v126, %v125
    %vm135 = vcmask 523264
    %v137 = vsel %vm135, %v95, 0
    %139 = vmatprep.subr.bf16.mxu0 0
    %140 = vmatpush1.bf16.msra.mxu0 %v127
    %141 = vmatprep.subr.bf16.mxu0 0
    %142 = vmatpush1.bf16.msra.mxu0 %v128
    %143 = vmatprep.subr.bf16.mxu0 0
    %144 = vmatpush1.bf16.msra.mxu0 %v129
    %145 = vmatprep.subr.bf16.mxu0 0
    %146 = vmatpush1.bf16.msra.mxu0 %v130
    %147 = vmatprep.subr.bf16.mxu0 0
    %148 = vmatpush1.bf16.msra.mxu0 0
    %149 = vmatprep.subr.bf16.mxu0 0
    %150 = vmatpush1.bf16.msra.mxu0 0
    %151 = vmatprep.subr.bf16.mxu0 0
    %152 = vmatpush1.bf16.msra.mxu0 0
    %153 = vmatprep.subr.bf16.mxu0 0
    %154 = vmatpush1.bf16.msra.mxu0 0
    %155 = vmatprep.subr.bf16.mxu0 0
    %156 = vmatpush1.bf16.msra.mxu0 0
    %157 = vmatprep.subr.bf16.mxu0 0
    %158 = vmatpush1.bf16.msra.mxu0 0
    %159 = vmatprep.subr.bf16.mxu0 0
    %160 = vmatpush1.bf16.msra.mxu0 0
    %161 = vmatprep.subr.bf16.mxu0 0
    %162 = vmatpush1.bf16.msra.mxu0 0
    %163 = vmatprep.subr.bf16.mxu0 0
    %164 = vmatpush1.bf16.msra.mxu0 0
    %165 = vmatprep.subr.bf16.mxu0 0
    %166 = vmatpush1.bf16.msra.mxu0 0
    %167 = vmatprep.subr.bf16.mxu0 0
    %168 = vmatpush1.bf16.msra.mxu0 0
    %169 = vmatprep.subr.bf16.mxu0 0
    %170 = vmatpush1.bf16.msra.mxu0 0
    %171 = vmatprep.mubr.bf16.mxu0 0
    %172 = vmatmul.mubr.bf16.gmra.mrb[0].mxu0 %v137
    %v173 = vpop.f32.mrb[0].mxu0
    %v174 = vadd.f32 %v109, %v173
    %v175 = vpop.f32.mrb[0].mxu0
    %v176 = vpop.f32.mrb[0].mxu0
    %v177 = vpop.f32.mrb[0].mxu0
    %178 = vdwg.mxu0
    %v179 = vmax.f32 %v174, 0.0
    %v180 = vpack.c.bf16 %v179, %v179
    %v181 = vld [vmem:[%s6] sm:$0xf]
    %v182 = vld [vmem:[%s6 + $0x4] sm:$0xf]
    %v183 = vld [vmem:[%s6 + $0x8] sm:$0xf]
    %v184 = vld [vmem:[%s6 + $0xc] sm:$0xf]
    %v185 = vld [vmem:[%s7] sm:$0x1]
    %v187 = vlaneseq
    %v188 = vshrl.u32 %v187, 7
    %v189 = vsub.s32 0, %v188
    %v190 = vrot.slane %v185, %v189
    %v196 = vunpack.c.l.b16 %v181
    %v197 = vunpack.c.l.b16 %v182
    %v198 = vunpack.c.l.b16 %v183
    %v199 = vunpack.c.l.b16 %v184
    %v200 = vpack.c.b16 %v197, %v196
    %v201 = vpack.c.b16 %v199, %v198
    %vm204 = vcmask 261120
    %v206 = vsel %vm204, %v180, 0
    %208 = vmatprep.subr.bf16.mxu0 0
    %209 = vmatpush1.bf16.msra.mxu0 %v200
    %210 = vmatprep.subr.bf16.mxu0 0
    %211 = vmatpush1.bf16.msra.mxu0 %v201
    %212 = vmatprep.subr.bf16.mxu0 0
    %213 = vmatpush1.bf16.msra.mxu0 0
    %214 = vmatprep.subr.bf16.mxu0 0
    %215 = vmatpush1.bf16.msra.mxu0 0
    %216 = vmatprep.subr.bf16.mxu0 0
    %217 = vmatpush1.bf16.msra.mxu0 0
    %218 = vmatprep.subr.bf16.mxu0 0
    %219 = vmatpush1.bf16.msra.mxu0 0
    %220 = vmatprep.subr.bf16.mxu0 0
    %221 = vmatpush1.bf16.msra.mxu0 0
    %222 = vmatprep.subr.bf16.mxu0 0
    %223 = vmatpush1.bf16.msra.mxu0 0
    %224 = vmatprep.subr.bf16.mxu0 0
    %225 = vmatpush1.bf16.msra.mxu0 0
    %226 = vmatprep.subr.bf16.mxu0 0
    %227 = vmatpush1.bf16.msra.mxu0 0
    %228 = vmatprep.subr.bf16.mxu0 0
    %229 = vmatpush1.bf16.msra.mxu0 0
    %230 = vmatprep.subr.bf16.mxu0 0
    %231 = vmatpush1.bf16.msra.mxu0 0
    %232 = vmatprep.subr.bf16.mxu0 0
    %233 = vmatpush1.bf16.msra.mxu0 0
    %234 = vmatprep.subr.bf16.mxu0 0
    %235 = vmatpush1.bf16.msra.mxu0 0
    %236 = vmatprep.subr.bf16.mxu0 0
    %237 = vmatpush1.bf16.msra.mxu0 0
    %238 = vmatprep.subr.bf16.mxu0 0
    %239 = vmatpush1.bf16.msra.mxu0 0
    %240 = vmatprep.mubr.bf16.mxu0 0
    %241 = vmatmul.mubr.bf16.gmra.mrb[0].mxu0 %v206
    %v242 = vpop.f32.mrb[0].mxu0
    %v243 = vadd.f32 %v190, %v242
    %v244 = vpop.f32.mrb[0].mxu0
    %v245 = vpop.f32.mrb[0].mxu0
    %v246 = vpop.f32.mrb[0].mxu0
    %247 = vdwg.mxu0
    %v248 = vtanh.pop %v243
    %v249 = vstv %s32
    %v250 = vmul.f32 %v249, %v248
    %vm251 = vcmask 64512
    %252 = vst.msk [vmem:[#allocation3] sm:$0xff] %vm251, %v250
    // Predicated region
    $region34: #{tpu_custom_call.1} parent=1 // pred_check
      _
    $region35: #{tpu_custom_call.1} parent=1 // pred_check_branch
      %254 = sbr.rel (0) target = $region37
    $region36: #{tpu_custom_call.1} parent=1 // pred_region
      %s256 = ssub.s32 128, 128
      %257 = vsyncadd [#allocation4], %s256
      %s259 = sshll.u32 [#allocation3], 4
      %s260 = int_to_ptr.vmem [resolvable:$true] %s259
      %262 = dma.vmem_to_hbm [thread:$0]  %s260, 128, %s8, [#allocation4]
    $region37: #{tpu_custom_call.1} parent=1 // pred_fallthru
      _
    // Predicated region
    $region38: #{tpu_custom_call.1} parent=1 // pred_check
      _
    $region39: #{tpu_custom_call.1} parent=1 // pred_check_branch
      %264 = sbr.rel (0) target = $region41
    $region40: #{tpu_custom_call.1} parent=1 // pred_region
      %265 = dma.done [#allocation4], 128
    $region41: #{tpu_custom_call.1} parent=1 // pred_fallthru
      _
    %266 = vsyncpa [#allocation4], 1

</llo_original>
